<compile_context>
chip_gen: v7x
topology: tpu7x:2x2x1
jax: 0.10.0
libtpu: 0.0.40
codegen_flags: <defaults>
</compile_context>

<pallas_src>
import jax
import jax.numpy as jnp
from jax import lax
from jax.experimental import pallas as pl
from jax.experimental.pallas import tpu as pltpu


# ----------------------------------------------------------------------------
# Generic tiled matmul + bias kernel (used for the input projection and the
# prediction head).  K is kept whole; M/N are tiled lane/sublane-aligned.
# ----------------------------------------------------------------------------
def _matmul_bias_kernel(x_ref, w_ref, b_ref, o_ref):
    o_ref[...] = (
        jnp.dot(x_ref[...], w_ref[...], preferred_element_type=jnp.float32)
        + b_ref[...]
    ).astype(o_ref.dtype)


def _pick_tile(dim, preferred, align):
    """Largest tile <= preferred that divides dim and is align-aligned."""
    if dim <= preferred:
        return dim  # full dim is always a legal block
    t = (preferred // align) * align
    while t >= align:
        if dim % t == 0:
            return t
        t -= align
    return dim


def matmul_bias(x, w, b, *, out_dtype=jnp.float32,
                preferred_tile_m=256, preferred_tile_n=2048):
    """(M,K) @ (K,N) + (1,N) with N-tiles on the OUTER grid axis so the weight
    is streamed from HBM exactly once; both axes are 'parallel' (megacore)."""
    M, K = x.shape
    K2, N = w.shape
    assert K == K2 and b.shape == (1, N)
    tile_m = _pick_tile(M, preferred_tile_m, 8)
    tile_n = _pick_tile(N, preferred_tile_n, 128)
    grid = (N // tile_n, M // tile_m)  # N outer, M inner -> w tile fetched once

    return pl.pallas_call(
        _matmul_bias_kernel,
        out_shape=jax.ShapeDtypeStruct((M, N), out_dtype),
        grid_spec=pltpu.PrefetchScalarGridSpec(
            num_scalar_prefetch=0,
            grid=grid,
            in_specs=[
                pl.BlockSpec((tile_m, K), lambda j, i: (i, 0)),   # activations
                pl.BlockSpec((K, tile_n), lambda j, i: (0, j)),   # weight tile
                pl.BlockSpec((1, tile_n), lambda j, i: (0, j)),   # bias tile
            ],
            out_specs=pl.BlockSpec((tile_m, tile_n), lambda j, i: (i, j)),
        ),
        compiler_params=pltpu.CompilerParams(
            dimension_semantics=("parallel", "parallel"),
        ),
    )(x, w, b)


# ----------------------------------------------------------------------------
# Recurrent LSTM kernel: grid over time chunks; h/c state resident in VMEM
# scratch; W_hh resident; gates_x (precomputed) streamed per chunk.
# ----------------------------------------------------------------------------
def _lstm_seq_kernel(gx_ref, h0_ref, c0_ref, whh_ref,
                     h_all_ref, h_out_ref, c_out_ref,
                     h_scr, c_scr):
    chunk = pl.program_id(0)
    Tb = gx_ref.shape[0]
    H = h_scr.shape[1]

    # Load initial state into resident VMEM scratch once.
    @pl.when(chunk == 0)
    def _init():
        h_scr[...] = h0_ref[...]
        c_scr[...] = c0_ref[...]

    def step(t, carry):
        # Only the recurrent half of the gate matmul runs inside the loop.
        gates = gx_ref[t] + jnp.dot(
            h_scr[...].astype(jnp.bfloat16), whh_ref[...],
            preferred_element_type=jnp.float32)
        # PyTorch LSTMCell gate order: input, forget, cell(g), output.
        i_g = jax.nn.sigmoid(gates[:, 0 * H:1 * H])
        f_g = jax.nn.sigmoid(gates[:, 1 * H:2 * H])
        g_g = jnp.tanh(gates[:, 2 * H:3 * H])
        o_g = jax.nn.sigmoid(gates[:, 3 * H:4 * H])

        c_t = f_g * c_scr[...] + i_g * g_g
        h_t = o_g * jnp.tanh(c_t)

        c_scr[...] = c_t
        h_scr[...] = h_t
        # h_t for every t, in bf16, feeds the decoupled prediction head.
        h_all_ref[t] = h_t.astype(h_all_ref.dtype)
        return carry

    lax.fori_loop(0, Tb, step, 0, unroll=Tb <= 16)

    # Final-state outputs written only on the last chunk.
    @pl.when(chunk == pl.num_programs(0) - 1)
    def _final():
        h_out_ref[...] = h_scr[...]
        c_out_ref[...] = c_scr[...]


def lstm_scan(gates_x, h0, c0, W_hh_bf, *, t_chunk=8):
    """Run the recurrence over all T steps; returns (h_all bf16, h_T, c_T)."""
    T, B, G = gates_x.shape
    H = h0.shape[1]
    Tb = t_chunk if (t_chunk > 0 and T % t_chunk == 0) else T
    n_chunks = T // Tb

    grid_spec = pltpu.PrefetchScalarGridSpec(
        num_scalar_prefetch=0,
        grid=(n_chunks,),
        in_specs=[
            pl.BlockSpec((Tb, B, G), lambda c: (c, 0, 0)),   # gates_x chunk
            pl.BlockSpec((B, H), lambda c: (0, 0)),          # h0
            pl.BlockSpec((B, H), lambda c: (0, 0)),          # c0
            pl.BlockSpec((H, G), lambda c: (0, 0)),          # W_hh (resident)
        ],
        out_specs=(
            pl.BlockSpec((Tb, B, H), lambda c: (c, 0, 0)),   # h_all chunk
            pl.BlockSpec((B, H), lambda c: (0, 0)),          # h_T
            pl.BlockSpec((B, H), lambda c: (0, 0)),          # c_T
        ),
        scratch_shapes=[
            pltpu.VMEM((B, H), jnp.float32),                 # h state (f32)
            pltpu.VMEM((B, H), jnp.float32),                 # c state (f32)
        ],
    )

    return pl.pallas_call(
        _lstm_seq_kernel,
        out_shape=(
            jax.ShapeDtypeStruct((T, B, H), jnp.bfloat16),
            jax.ShapeDtypeStruct((B, H), jnp.float32),
            jax.ShapeDtypeStruct((B, H), jnp.float32),
        ),
        grid_spec=grid_spec,
        compiler_params=pltpu.CompilerParams(
            # The recurrence carries across chunks -> strictly sequential.
            dimension_semantics=("arbitrary",),
        ),
    )(gates_x, h0, c0, W_hh_bf)


# ----------------------------------------------------------------------------
# Full T-step LM forward (and single-step API matching LM.forward).
# ----------------------------------------------------------------------------
def lm_forward_seq(word_emb_seq, state, params, *, t_chunk=8, tile_v=2048):
    """Fused T-step LM forward: returns (logits (T,B,V), (h_T, c_T))."""
    h0, c0 = state
    W_ih, W_hh, b, W_pred, b_pred = params
    T, B, E = word_emb_seq.shape
    H = h0.shape[1]
    V = W_pred.shape[1]

    # Phase 1: hoisted input projection, M = T*B MXU rows, no E padding.
    x_flat = word_emb_seq.reshape(T * B, E).astype(jnp.bfloat16)
    gates_x = matmul_bias(x_flat, W_ih.astype(jnp.bfloat16), b,
                          out_dtype=jnp.float32)
    gates_x = gates_x.reshape(T, B, 4 * H)

    # Phase 2: sequential recurrence (only h @ W_hh per step).
    h_all, h_T, c_T = lstm_scan(gates_x, h0, c0,
                                W_hh.astype(jnp.bfloat16), t_chunk=t_chunk)

    # Phase 3: prediction head as one (T*B, H) @ (H, V) matmul; W_pred is
    # streamed from HBM once; both grid axes parallel (v7x megacore).
    logits_flat = matmul_bias(h_all.reshape(T * B, H),
                              W_pred.astype(jnp.bfloat16), b_pred,
                              out_dtype=jnp.float32,
                              preferred_tile_n=tile_v)
    logits = logits_flat.reshape(T, B, V)
    return logits, (h_T, c_T)


def lm_forward(word_emb, state, params, *, tile_v=2048):
    """Single-step LM.forward(word_emb, state) -> (logits, (h_t, c_t))."""
    logits, state_t = lm_forward_seq(word_emb[None], state, params,
                                     t_chunk=1, tile_v=tile_v)
    return logits[0], state_t


# ----------------------------------------------------------------------------
# Parameters / reference / test harness
# ----------------------------------------------------------------------------
def make_params(key, word_embed_size, hidden_size, vocab_size):
    """Deterministic synthetic parameters (PyTorch-style uniform init)."""
    k = jax.random.split(key, 7)
    bound = 1.0 / jnp.sqrt(hidden_size)
    W_ih = jax.random.uniform(k[0], (word_embed_size, 4 * hidden_size),
                              jnp.float32, -bound, bound)
    W_hh = jax.random.uniform(k[1], (hidden_size, 4 * hidden_size),
                              jnp.float32, -bound, bound)
    b_ih = jax.random.uniform(k[2], (1, 4 * hidden_size), jnp.float32, -bound, bound)
    b_hh = jax.random.uniform(k[3], (1, 4 * hidden_size), jnp.float32, -bound, bound)
    W_pred = jax.random.uniform(k[4], (hidden_size, vocab_size),
                                jnp.float32, -bound, bound)
    b_pred = jax.random.uniform(k[5], (1, vocab_size), jnp.float32, -bound, bound)
    # Embedding table: pure lookup, done outside the kernel (glue).
    embed = jax.random.normal(k[6], (vocab_size, word_embed_size), jnp.float32)
    return (W_ih, W_hh, b_ih + b_hh, W_pred, b_pred), embed


def reference_seq(word_emb_seq, state, params):
    """Pure-JAX f32 reference (scan over LSTMCell + Linear)."""
    W_ih, W_hh, b, W_pred, b_pred = params
    H = state[0].shape[1]

    def step(carry, x):
        h, c = carry
        gates = x @ W_ih + h @ W_hh + b
        i = jax.nn.sigmoid(gates[:, 0 * H:1 * H])
        f = jax.nn.sigmoid(gates[:, 1 * H:2 * H])
        g = jnp.tanh(gates[:, 2 * H:3 * H])
        o = jax.nn.sigmoid(gates[:, 3 * H:4 * H])
        c_t = f * c + i * g
        h_t = o * jnp.tanh(c_t)
        logits = h_t @ W_pred + b_pred
        return (h_t, c_t), logits

    (h_T, c_T), logits = lax.scan(step, state, word_emb_seq)
    return logits, (h_T, c_T)


if __name__ == "__main__":
    # Small shapes consistent with the module's constructor.
    batch_size = 8
    hidden_size = 128
    word_embed_size = 32
    vocab_size = 512
    seq_len = 8

    key = jax.random.PRNGKey(0)
    kp, kw, kh, kc = jax.random.split(key, 4)

    params, embed_table = make_params(kp, word_embed_size, hidden_size, vocab_size)

    # nn.Embedding lookup for T timesteps (glue, outside the kernel).
    word_ids = jax.random.randint(kw, (seq_len, batch_size), 0, vocab_size)
    word_emb_seq = embed_table[word_ids]                      # (T, B, E)

    # init_state() is zeros; use small nonzero state for a stronger test.
    h0 = jax.random.normal(kh, (batch_size, hidden_size), jnp.float32) * 0.1
    c0 = jax.random.normal(kc, (batch_size, hidden_size), jnp.float32) * 0.1

    logits, (h_t, c_t) = lm_forward_seq(word_emb_seq, (h0, c0), params)
    jax.block_until_ready((logits, h_t, c_t))

    # Reference on the same bf16-rounded operands the kernel feeds the MXU
    # (bf16 matmul with f32 accumulation -> loose tolerance).
    W_ih, W_hh, b, W_pred, b_pred = params
    bf = lambda a: a.astype(jnp.bfloat16).astype(jnp.float32)
    params_rounded = (bf(W_ih), bf(W_hh), b, bf(W_pred), b_pred)
    ref_logits, (ref_h, ref_c) = reference_seq(bf(word_emb_seq), (h0, c0),
                                               params_rounded)

    assert jnp.allclose(logits, ref_logits, atol=5e-2, rtol=5e-2), \
        float(jnp.max(jnp.abs(logits - ref_logits)))
    assert jnp.allclose(h_t, ref_h, atol=3e-2, rtol=3e-2)
    assert jnp.allclose(c_t, ref_c, atol=3e-2, rtol=3e-2)

    # Single-step API parity with LM.forward.
    logit1, (h1, c1) = lm_forward(word_emb_seq[0], (h0, c0), params)
    jax.block_until_ready((logit1, h1, c1))
    assert jnp.allclose(logit1, ref_logits[0], atol=5e-2, rtol=5e-2)

    # TODO(synk): train_on_batch / test_on_batch (Adam optimizer, softmax loss,
    # manual backward) are training-side glue and are not translated.

    print("KERNEL_OK")
</pallas_src>

<mosaic_0001>
module attributes {stable_mosaic.version = 11 : i64} {
  func.func @_matmul_bias_kernel(%arg0: i32, %arg1: i32, %arg2: memref<64x32xbf16, #tpu.memory_space<vmem>>, %arg3: memref<32x512xbf16, #tpu.memory_space<vmem>>, %arg4: memref<1x512xf32, #tpu.memory_space<vmem>>, %arg5: memref<64x512xf32, #tpu.memory_space<vmem>>) attributes {dimension_semantics = [#tpu.dimension_semantics<parallel>, #tpu.dimension_semantics<parallel>], iteration_bounds = array<i64: 1, 1>, scalar_prefetch = 0 : i64, scratch_operands = 0 : i64, tpu.core_type = #tpu.core_type<tc>, window_params = [{transform_indices = @transform_0, window_bounds = array<i64: 64, 32>}, {transform_indices = @transform_1, window_bounds = array<i64: 32, 512>}, {transform_indices = @transform_2, window_bounds = array<i64: 1, 512>}, {transform_indices = @transform_3, window_bounds = array<i64: 64, 512>}]} {
    %c0 = arith.constant 0 : index
    %c0_0 = arith.constant 0 : index
    %0 = vector.load %arg2[%c0, %c0_0] : memref<64x32xbf16, #tpu.memory_space<vmem>>, vector<64x32xbf16>
    %c0_1 = arith.constant 0 : index
    %c0_2 = arith.constant 0 : index
    %1 = vector.load %arg3[%c0_1, %c0_2] : memref<32x512xbf16, #tpu.memory_space<vmem>>, vector<32x512xbf16>
    %cst = arith.constant dense<0.000000e+00> : vector<64x512xf32>
    %2 = tpu.matmul %0, %1, %cst {dimension_numbers = #tpu.dot_dimension_numbers<[1], [0], [0], [1], [0, 0, 1, 1], [], []>} : vector<64x32xbf16>, vector<32x512xbf16>, vector<64x512xf32> -> vector<64x512xf32>
    %c0_3 = arith.constant 0 : index
    %c0_4 = arith.constant 0 : index
    %3 = vector.load %arg4[%c0_3, %c0_4] : memref<1x512xf32, #tpu.memory_space<vmem>>, vector<1x512xf32>
    %4 = vector.broadcast %3 : vector<1x512xf32> to vector<64x512xf32>
    %5 = arith.addf %2, %4 : vector<64x512xf32>
    %c0_5 = arith.constant 0 : index
    %c0_6 = arith.constant 0 : index
    %6 = vector.load %arg5[%c0_5, %c0_6] : memref<64x512xf32, #tpu.memory_space<vmem>>, vector<64x512xf32>
    tpu.vector_store %arg5[%c0_5, %c0_6], %5 {strides = array<i32>} : memref<64x512xf32, #tpu.memory_space<vmem>>, vector<64x512xf32>,
    return
  }
  func.func @transform_0(%arg0: i32, %arg1: i32) -> (i32, i32) {
    %c0_i32 = arith.constant 0 : i32
    %c0_i32_0 = arith.constant 0 : i32
    return %arg1, %c0_i32 : i32, i32
  }
  func.func @transform_1(%arg0: i32, %arg1: i32) -> (i32, i32) {
    %c0_i32 = arith.constant 0 : i32
    %c0_i32_0 = arith.constant 0 : i32
    return %c0_i32, %arg0 : i32, i32
  }
  func.func @transform_2(%arg0: i32, %arg1: i32) -> (i32, i32) {
    %c0_i32 = arith.constant 0 : i32
    %c0_i32_0 = arith.constant 0 : i32
    return %c0_i32, %arg0 : i32, i32
  }
  func.func @transform_3(%arg0: i32, %arg1: i32) -> (i32, i32) {
    %c0_i32 = arith.constant 0 : i32
    return %arg1, %arg0 : i32, i32
  }
}

</mosaic_0001>

<llo_original>
// kernel: tpu_custom_call.1
$region0: #{tpu_custom_call.1}
  #allocation0 [shape = 'u32[]', space=smem, size = 0x4, offset = 0x4, fixed_abs, tag = 'smem constant byte address 0x4 - core index']
  #allocation1 [shape = 'u32[144,128]{1,0:T(1,128)}', space=vmem, size = 0x12000, scoped, tag = 'internal scratch']
  %s0 = inlined_call_operand.vmem [shape: bf16[64,32], index: 0, kind: input, shape index: {}]
  %s1 = inlined_call_operand.hbm [shape: bf16[32,512], index: 1, kind: input, shape index: {}]
  %s2 = inlined_call_operand.vmem [shape: f32[1,512], index: 2, kind: input, shape index: {}]
  %s3 = inlined_call_operand.hbm [shape: f32[64,512], index: 3, kind: output, shape index: {}]
  %s4 = sld [smem:[#allocation0]]
  $region26: #{tpu_custom_call.1} parent=0
    _
  %s6 = ssub.s32 1, %s4
  %s7 = scalar_select 0, %s6, %s4
  $region1: #{tpu_custom_call.1} parent=0
    #allocation2 [shape = 'u8[32768]{0}', space=vmem, size = 0x8000, scoped, tag = 'input window, operand 1, single buffered']
    #allocation3 [shape = 's32[1]{0}', space=sflag, size = 0x4, scoped, tag = 'scoped memory for tpu_custom_call.1']
    #allocation4 [shape = 's32[1]{0}', space=sflag, size = 0x4, scoped, tag = 'scoped memory for tpu_custom_call.1']
    #allocation5 [shape = 'u8[131072]{0}', space=vmem, size = 0x20000, scoped, tag = 'output window, operand 0, single buffered']
    %8 = vsyncpa [#allocation3], 0
    %9 = vsyncpa [#allocation4], 0
    // Predicated region
    $region2: #{tpu_custom_call.1} parent=1 // pred_check
      _
    $region3: #{tpu_custom_call.1} parent=1 // pred_check_branch
      %11 = sbr.rel (0) target = $region5
    $region4: #{tpu_custom_call.1} parent=1 // pred_region
      _
    $region5: #{tpu_custom_call.1} parent=1 // pred_fallthru
      _
    // Predicated region
    $region6: #{tpu_custom_call.1} parent=1 // pred_check
      _
    $region7: #{tpu_custom_call.1} parent=1 // pred_check_branch
      %13 = sbr.rel (0) target = $region9
    $region8: #{tpu_custom_call.1} parent=1 // pred_region
      %s15 = ssub.s32 1024, 1024
      %16 = vsyncadd [#allocation3], %s15
      %s17 = sshll.u32 [#allocation2], 4
      %s18 = int_to_ptr.vmem [resolvable:$true] %s17
      %23 = dma.hbm_to_vmem [thread:$0]  %s1, 1024, %s18, [#allocation3], 256, 256, 16
    $region9: #{tpu_custom_call.1} parent=1 // pred_fallthru
      _
    // Predicated region
    $region10: #{tpu_custom_call.1} parent=1 // pred_check
      _
    $region11: #{tpu_custom_call.1} parent=1 // pred_check_branch
      %25 = sbr.rel (0) target = $region13
    $region12: #{tpu_custom_call.1} parent=1 // pred_region
      _
    $region13: #{tpu_custom_call.1} parent=1 // pred_fallthru
      _
    // Predicated region
    $region14: #{tpu_custom_call.1} parent=1 // pred_check
      _
    $region15: #{tpu_custom_call.1} parent=1 // pred_check_branch
      %27 = sbr.rel (0) target = $region17
    $region16: #{tpu_custom_call.1} parent=1 // pred_region
      %28 = dma.done [#allocation3], 1024
    $region17: #{tpu_custom_call.1} parent=1 // pred_fallthru
      _
    %v30 = vld [vmem:[%s0] sm:$0xf]
    %v31 = vld [vmem:[%s0 + $0x4] sm:$0xf]
    %v32 = vld [vmem:[%s0 + $0x8] sm:$0xf]
    %v33 = vld [vmem:[%s0 + $0xc] sm:$0xf]
    %v34 = vld [vmem:[%s0 + $0x10] sm:$0xf]
    %v35 = vld [vmem:[%s0 + $0x14] sm:$0xf]
    %v36 = vld [vmem:[%s0 + $0x18] sm:$0xf]
    %v37 = vld [vmem:[%s0 + $0x1c] sm:$0xf]
    %v38 = vld [vmem:[#allocation2] sm:$0xff]
    %v39 = vld [vmem:[#allocation2 + $0x8] sm:$0xff]
    %v40 = vld [vmem:[#allocation2 + $0x10] sm:$0xff]
    %v41 = vld [vmem:[#allocation2 + $0x18] sm:$0xff]
    %v42 = vld [vmem:[#allocation2 + $0x20] sm:$0xff]
    %v43 = vld [vmem:[#allocation2 + $0x28] sm:$0xff]
    %v44 = vld [vmem:[#allocation2 + $0x30] sm:$0xff]
    %v45 = vld [vmem:[#allocation2 + $0x38] sm:$0xff]
    %v46 = vld [vmem:[%s2] sm:$0xf]
    %v48 = vlaneseq
    %v49 = vshrl.u32 %v48, 7
    %v50 = vsub.s32 0, %v49
    %v51 = vrot.slane %v46, %v50
    %v52 = vlaneseq
    %v53 = vshrl.u32 %v52, 7
    %v54 = vsub.s32 1, %v53
    %v55 = vrot.slane %v46, %v54
    %v56 = vlaneseq
    %v57 = vshrl.u32 %v56, 7
    %v58 = vsub.s32 2, %v57
    %v59 = vrot.slane %v46, %v58
    %v60 = vlaneseq
    %v61 = vshrl.u32 %v60, 7
    %v62 = vsub.s32 3, %v61
    %v63 = vrot.slane %v46, %v62
    %v76 = vunpack.c.l.b16 %v30
    %v77 = vunpack.c.l.b16 %v31
    %v78 = vunpack.c.l.b16 %v32
    %v79 = vunpack.c.l.b16 %v33
    %v80 = vunpack.c.l.b16 %v34
    %v81 = vunpack.c.l.b16 %v35
    %v82 = vunpack.c.l.b16 %v36
    %v83 = vunpack.c.l.b16 %v37
    %v84 = vpack.c.b16 %v77, %v76
    %v85 = vpack.c.b16 %v79, %v78
    %v86 = vpack.c.b16 %v81, %v80
    %v87 = vpack.c.b16 %v83, %v82
    %v96 = vunpack.c.l.b16 %v38
    %v97 = vunpack.c.h.b16 %v38
    %v98 = vunpack.c.l.b16 %v39
    %v99 = vunpack.c.h.b16 %v39
    %v100 = vunpack.c.l.b16 %v40
    %v101 = vunpack.c.h.b16 %v40
    %v102 = vunpack.c.l.b16 %v41
    %v103 = vunpack.c.h.b16 %v41
    %v104 = vunpack.c.l.b16 %v42
    %v105 = vunpack.c.h.b16 %v42
    %v106 = vunpack.c.l.b16 %v43
    %v107 = vunpack.c.h.b16 %v43
    %v108 = vunpack.c.l.b16 %v44
    %v109 = vunpack.c.h.b16 %v44
    %v110 = vunpack.c.l.b16 %v45
    %v111 = vunpack.c.h.b16 %v45
    %v112 = vpack.c.b16 %v100, %v96
    %v113 = vpack.c.b16 %v101, %v97
    %v114 = vpack.c.b16 %v102, %v98
    %v115 = vpack.c.b16 %v103, %v99
    %v116 = vpack.c.b16 %v108, %v104
    %v117 = vpack.c.b16 %v109, %v105
    %v118 = vpack.c.b16 %v110, %v106
    %v119 = vpack.c.b16 %v111, %v107
    %vm128 = vcmask 261120
    %v130 = vsel %vm128, %v84, 0
    %v133 = vsel %vm128, %v85, 0
    %v136 = vsel %vm128, %v86, 0
    %v139 = vsel %vm128, %v87, 0
    %141 = vmatprep.subr.bf16.mxu0 %v113
    %142 = vmatpush1.bf16.msra.mxu0 %v112
    %143 = vmatprep.subr.bf16.mxu0 %v117
    %144 = vmatpush1.bf16.msra.mxu0 %v116
    %145 = vmatprep.subr.bf16.mxu0 0
    %146 = vmatpush1.bf16.msra.mxu0 0
    %147 = vmatprep.subr.bf16.mxu0 0
    %148 = vmatpush1.bf16.msra.mxu0 0
    %149 = vmatprep.subr.bf16.mxu0 0
    %150 = vmatpush1.bf16.msra.mxu0 0
    %151 = vmatprep.subr.bf16.mxu0 0
    %152 = vmatpush1.bf16.msra.mxu0 0
    %153 = vmatprep.subr.bf16.mxu0 0
    %154 = vmatpush1.bf16.msra.mxu0 0
    %155 = vmatprep.subr.bf16.mxu0 0
    %156 = vmatpush1.bf16.msra.mxu0 0
    %157 = vmatprep.subr.bf16.mxu0 0
    %158 = vmatpush1.bf16.msra.mxu0 0
    %159 = vmatprep.subr.bf16.mxu0 0
    %160 = vmatpush1.bf16.msra.mxu0 0
    %161 = vmatprep.subr.bf16.mxu0 0
    %162 = vmatpush1.bf16.msra.mxu0 0
    %163 = vmatprep.subr.bf16.mxu0 0
    %164 = vmatpush1.bf16.msra.mxu0 0
    %165 = vmatprep.subr.bf16.mxu0 0
    %166 = vmatpush1.bf16.msra.mxu0 0
    %167 = vmatprep.subr.bf16.mxu0 0
    %168 = vmatpush1.bf16.msra.mxu0 0
    %169 = vmatprep.subr.bf16.mxu0 0
    %170 = vmatpush1.bf16.msra.mxu0 0
    %171 = vmatprep.subr.bf16.mxu0 0
    %172 = vmatpush1.bf16.msra.mxu0 0
    %173 = vmatprep.mubr.bf16.mxu0 0
    %174 = vmatmul.mubr.bf16.gmra.mrb[0].mxu0 %v130
    %v175 = vpop.f32.mrb[0].mxu0
    %v176 = vadd.f32 %v51, %v175
    %v177 = vpop.f32.mrb[0].mxu0
    %v178 = vadd.f32 %v55, %v177
    %v179 = vpop.f32.mrb[0].mxu0
    %v180 = vadd.f32 %v51, %v179
    %v181 = vpop.f32.mrb[0].mxu0
    %v182 = vadd.f32 %v55, %v181
    %183 = vmatprep.mubr.bf16.mxu0 0
    %184 = vmatmul.mubr.bf16.gmra.mrb[0].mxu0 %v133
    %v185 = vpop.f32.mrb[0].mxu0
    %v186 = vadd.f32 %v51, %v185
    %v187 = vpop.f32.mrb[0].mxu0
    %v188 = vadd.f32 %v55, %v187
    %v189 = vpop.f32.mrb[0].mxu0
    %v190 = vadd.f32 %v51, %v189
    %v191 = vpop.f32.mrb[0].mxu0
    %v192 = vadd.f32 %v55, %v191
    %193 = vmatprep.mubr.bf16.mxu0 0
    %194 = vmatmul.mubr.bf16.gmra.mrb[0].mxu0 %v136
    %v195 = vpop.f32.mrb[0].mxu0
    %v196 = vadd.f32 %v51, %v195
    %v197 = vpop.f32.mrb[0].mxu0
    %v198 = vadd.f32 %v55, %v197
    %v199 = vpop.f32.mrb[0].mxu0
    %v200 = vadd.f32 %v51, %v199
    %v201 = vpop.f32.mrb[0].mxu0
    %v202 = vadd.f32 %v55, %v201
    %203 = vmatprep.mubr.bf16.mxu0 0
    %204 = vmatmul.mubr.bf16.gmra.mrb[0].mxu0 %v139
    %v205 = vpop.f32.mrb[0].mxu0
    %v206 = vadd.f32 %v51, %v205
    %v207 = vpop.f32.mrb[0].mxu0
    %v208 = vadd.f32 %v55, %v207
    %v209 = vpop.f32.mrb[0].mxu0
    %v210 = vadd.f32 %v51, %v209
    %v211 = vpop.f32.mrb[0].mxu0
    %v212 = vadd.f32 %v55, %v211
    %213 = vdwg.mxu0
    %214 = vmatprep.subr.bf16.mxu0 %v115
    %215 = vmatpush1.bf16.msra.mxu0 %v114
    %216 = vmatprep.subr.bf16.mxu0 %v119
    %217 = vmatpush1.bf16.msra.mxu0 %v118
    %218 = vmatprep.subr.bf16.mxu0 0
    %219 = vmatpush1.bf16.msra.mxu0 0
    %220 = vmatprep.subr.bf16.mxu0 0
    %221 = vmatpush1.bf16.msra.mxu0 0
    %222 = vmatprep.subr.bf16.mxu0 0
    %223 = vmatpush1.bf16.msra.mxu0 0
    %224 = vmatprep.subr.bf16.mxu0 0
    %225 = vmatpush1.bf16.msra.mxu0 0
    %226 = vmatprep.subr.bf16.mxu0 0
    %227 = vmatpush1.bf16.msra.mxu0 0
    %228 = vmatprep.subr.bf16.mxu0 0
    %229 = vmatpush1.bf16.msra.mxu0 0
    %230 = vmatprep.subr.bf16.mxu0 0
    %231 = vmatpush1.bf16.msra.mxu0 0
    %232 = vmatprep.subr.bf16.mxu0 0
    %233 = vmatpush1.bf16.msra.mxu0 0
    %234 = vmatprep.subr.bf16.mxu0 0
    %235 = vmatpush1.bf16.msra.mxu0 0
    %236 = vmatprep.subr.bf16.mxu0 0
    %237 = vmatpush1.bf16.msra.mxu0 0
    %238 = vmatprep.subr.bf16.mxu0 0
    %239 = vmatpush1.bf16.msra.mxu0 0
    %240 = vmatprep.subr.bf16.mxu0 0
    %241 = vmatpush1.bf16.msra.mxu0 0
    %242 = vmatprep.subr.bf16.mxu0 0
    %243 = vmatpush1.bf16.msra.mxu0 0
    %244 = vmatprep.subr.bf16.mxu0 0
    %245 = vmatpush1.bf16.msra.mxu0 0
    %246 = vmatprep.mubr.bf16.mxu0 0
    %247 = vmatmul.mubr.bf16.gmra.mrb[0].mxu0 %v130
    %v248 = vpop.f32.mrb[0].mxu0
    %v249 = vadd.f32 %v59, %v248
    %v250 = vpop.f32.mrb[0].mxu0
    %v251 = vadd.f32 %v63, %v250
    %v252 = vpop.f32.mrb[0].mxu0
    %v253 = vadd.f32 %v59, %v252
    %v254 = vpop.f32.mrb[0].mxu0
    %v255 = vadd.f32 %v63, %v254
    %256 = vmatprep.mubr.bf16.mxu0 0
    %257 = vmatmul.mubr.bf16.gmra.mrb[0].mxu0 %v133
    %v258 = vpop.f32.mrb[0].mxu0
    %v259 = vadd.f32 %v59, %v258
    %v260 = vpop.f32.mrb[0].mxu0
    %v261 = vadd.f32 %v63, %v260
    %v262 = vpop.f32.mrb[0].mxu0
    %v263 = vadd.f32 %v59, %v262
    %v264 = vpop.f32.mrb[0].mxu0
    %v265 = vadd.f32 %v63, %v264
    %266 = vmatprep.mubr.bf16.mxu0 0
    %267 = vmatmul.mubr.bf16.gmra.mrb[0].mxu0 %v136
    %v268 = vpop.f32.mrb[0].mxu0
    %v269 = vadd.f32 %v59, %v268
    %v270 = vpop.f32.mrb[0].mxu0
    %v271 = vadd.f32 %v63, %v270
    %v272 = vpop.f32.mrb[0].mxu0
    %v273 = vadd.f32 %v59, %v272
    %v274 = vpop.f32.mrb[0].mxu0
    %v275 = vadd.f32 %v63, %v274
    %276 = vmatprep.mubr.bf16.mxu0 0
    %277 = vmatmul.mubr.bf16.gmra.mrb[0].mxu0 %v139
    %v278 = vpop.f32.mrb[0].mxu0
    %v279 = vadd.f32 %v59, %v278
    %v280 = vpop.f32.mrb[0].mxu0
    %v281 = vadd.f32 %v63, %v280
    %v282 = vpop.f32.mrb[0].mxu0
    %v283 = vadd.f32 %v59, %v282
    %v284 = vpop.f32.mrb[0].mxu0
    %v285 = vadd.f32 %v63, %v284
    %286 = vdwg.mxu0
    %287 = vst [vmem:[#allocation5] sm:$0xff] %v176
    %288 = vst [vmem:[#allocation5 + $0x8] sm:$0xff] %v178
    %289 = vst [vmem:[#allocation5 + $0x10] sm:$0xff] %v249
    %290 = vst [vmem:[#allocation5 + $0x18] sm:$0xff] %v251
    %291 = vst [vmem:[#allocation5 + $0x20] sm:$0xff] %v180
    %292 = vst [vmem:[#allocation5 + $0x28] sm:$0xff] %v182
    %293 = vst [vmem:[#allocation5 + $0x30] sm:$0xff] %v253
    %294 = vst [vmem:[#allocation5 + $0x38] sm:$0xff] %v255
    %295 = vst [vmem:[#allocation5 + $0x40] sm:$0xff] %v186
    %296 = vst [vmem:[#allocation5 + $0x48] sm:$0xff] %v188
    %297 = vst [vmem:[#allocation5 + $0x50] sm:$0xff] %v259
    %298 = vst [vmem:[#allocation5 + $0x58] sm:$0xff] %v261
    %299 = vst [vmem:[#allocation5 + $0x60] sm:$0xff] %v190
    %300 = vst [vmem:[#allocation5 + $0x68] sm:$0xff] %v192
    %301 = vst [vmem:[#allocation5 + $0x70] sm:$0xff] %v263
    %302 = vst [vmem:[#allocation5 + $0x78] sm:$0xff] %v265
    %303 = vst [vmem:[#allocation5 + $0x80] sm:$0xff] %v196
    %304 = vst [vmem:[#allocation5 + $0x88] sm:$0xff] %v198
    %305 = vst [vmem:[#allocation5 + $0x90] sm:$0xff] %v269
    %306 = vst [vmem:[#allocation5 + $0x98] sm:$0xff] %v271
    %307 = vst [vmem:[#allocation5 + $0xa0] sm:$0xff] %v200
    %308 = vst [vmem:[#allocation5 + $0xa8] sm:$0xff] %v202
    %309 = vst [vmem:[#allocation5 + $0xb0] sm:$0xff] %v273
    %310 = vst [vmem:[#allocation5 + $0xb8] sm:$0xff] %v275
    %311 = vst [vmem:[#allocation5 + $0xc0] sm:$0xff] %v206
    %312 = vst [vmem:[#allocation5 + $0xc8] sm:$0xff] %v208
    %313 = vst [vmem:[#allocation5 + $0xd0] sm:$0xff] %v279
    %314 = vst [vmem:[#allocation5 + $0xd8] sm:$0xff] %v281
    %315 = vst [vmem:[#allocation5 + $0xe0] sm:$0xff] %v210
    %316 = vst [vmem:[#allocation5 + $0xe8] sm:$0xff] %v212
    %317 = vst [vmem:[#allocation5 + $0xf0] sm:$0xff] %v283
    %318 = vst [vmem:[#allocation5 + $0xf8] sm:$0xff] %v285
    // Predicated region
    $region18: #{tpu_custom_call.1} parent=1 // pred_check
      _
    $region19: #{tpu_custom_call.1} parent=1 // pred_check_branch
      %320 = sbr.rel (0) target = $region21
    $region20: #{tpu_custom_call.1} parent=1 // pred_region
      %s322 = ssub.s32 4096, 4096
      %323 = vsyncadd [#allocation4], %s322
      %s324 = sshll.u32 [#allocation5], 4
      %s325 = int_to_ptr.vmem [resolvable:$true] %s324
      %330 = dma.vmem_to_hbm [thread:$0]  %s325, 4096, %s3, [#allocation4], 512, 512, 32
    $region21: #{tpu_custom_call.1} parent=1 // pred_fallthru
      _
    // Predicated region
    $region22: #{tpu_custom_call.1} parent=1 // pred_check
      _
    $region23: #{tpu_custom_call.1} parent=1 // pred_check_branch
      %332 = sbr.rel (0) target = $region25
    $region24: #{tpu_custom_call.1} parent=1 // pred_region
      %333 = dma.done [#allocation4], 4096
    $region25: #{tpu_custom_call.1} parent=1 // pred_fallthru
      _
    %334 = vsyncpa [#allocation3], 1
    %335 = vsyncpa [#allocation4], 1

</llo_original>
